<compile_context>
chip_gen: v5e
topology: v5e:2x2
jax: 0.10.0
libtpu: 0.0.40
codegen_flags: <defaults>
</compile_context>

<pallas_src>
import functools

import jax
import jax.numpy as jnp
from jax.experimental import pallas as pl
from jax.experimental.pallas import tpu as pltpu


def _mapping_kernel(x_ref, w_stack_ref, b_stack_ref, w_head_ref, b_head_ref,
                    out_ref):
    x = x_ref[...].astype(jnp.float32)

    # F.normalize(x, dim=-1): x / max(||x||, 1e-12)  ==  x * rsqrt(max(||x||^2, 1e-24))
    # (rsqrt runs on the EUP slot; equivalent clamp on the squared norm.)
    ss = jnp.sum(x * x, axis=-1, keepdims=True)
    h = x * jax.lax.rsqrt(jnp.maximum(ss, 1e-24))

    b_stack = b_stack_ref[...].astype(jnp.float32)          # (depth, H)

    # depth x (Linear + LeakyReLU(0.2)); static unroll over stacked weights.
    for i in range(w_stack_ref.shape[0]):
        w = w_stack_ref[i].astype(jnp.float32)               # (H, H), static slice
        h = jnp.dot(h, w, preferred_element_type=jnp.float32) + b_stack[i:i + 1, :]
        h = jnp.where(h >= 0.0, h, 0.2 * h)

    # Fused gamma|beta head: one matmul, one lane-dense (TB, head_width) store.
    out = (jnp.dot(h, w_head_ref[...].astype(jnp.float32),
                   preferred_element_type=jnp.float32)
           + b_head_ref[...].astype(jnp.float32))
    out_ref[...] = out.astype(out_ref.dtype)


def pack_params(params, out_features, depth=3, lane=128):
    """Pack per-layer params into the fused/stacked layout the kernel expects."""
    w_stack = jnp.stack([params[f"w{i + 1}"] for i in range(depth)])     # (depth, H, H)
    b_stack = jnp.concatenate([params[f"b{i + 1}"] for i in range(depth)],
                              axis=0)                                    # (depth, H)
    w_head = jnp.concatenate([params["wg"], params["wb"]], axis=1)       # (H, 2*O)
    b_head = jnp.concatenate([params["bg"], params["bb"]], axis=1)       # (1, 2*O)
    two_out = 2 * out_features
    head_width = max(lane, ((two_out + lane - 1) // lane) * lane)
    if head_width > two_out:  # zero-pad head to a lane-dense width; sliced off outside
        w_head = jnp.pad(w_head, ((0, 0), (0, head_width - two_out)))
        b_head = jnp.pad(b_head, ((0, 0), (0, head_width - two_out)))
    return {"w_stack": w_stack, "b_stack": b_stack,
            "w_head": w_head, "b_head": b_head}


def mapping_network_pallas(x, packed, out_features, block_batch=512):
    """x: (batch, hidden). packed: output of pack_params. Returns (gamma, beta)."""
    batch, hidden = x.shape
    w_stack = packed["w_stack"]
    b_stack = packed["b_stack"]
    w_head = packed["w_head"]
    b_head = packed["b_head"]
    head_width = w_head.shape[1]

    # Batch tile: multiple of 8 (f32 sublane), capped so tiny batches use one block.
    tb = min(block_batch, ((batch + 7) // 8) * 8)
    grid = (pl.cdiv(batch, tb),)

    out = pl.pallas_call(
        _mapping_kernel,
        out_shape=jax.ShapeDtypeStruct((batch, head_width), x.dtype),
        grid=grid,
        in_specs=[
            pl.BlockSpec((tb, hidden), lambda i: (i, 0)),          # x: tiled over batch
            pl.BlockSpec(w_stack.shape, lambda i: (0, 0, 0)),      # weights stay resident
            pl.BlockSpec(b_stack.shape, lambda i: (0, 0)),
            pl.BlockSpec(w_head.shape, lambda i: (0, 0)),
            pl.BlockSpec(b_head.shape, lambda i: (0, 0)),
        ],
        out_specs=pl.BlockSpec((tb, head_width), lambda i: (i, 0)),
        compiler_params=pltpu.CompilerParams(
            dimension_semantics=("parallel",)),
    )(x, w_stack, b_stack, w_head, b_head)

    gamma = out[:, :out_features]
    beta = out[:, out_features:2 * out_features]
    return gamma, beta


def init_params(key, hidden_features, out_features, depth=3):
    """Deterministic PyTorch-Linear-style init (uniform +/- 1/sqrt(fan_in)).

    Weights stored as (in_features, out_features); biases as (1, out_features).
    """
    params = {}
    names = [f"w{i + 1}" for i in range(depth)] + ["wg", "wb"]
    fan_ins = [hidden_features] * depth + [hidden_features, hidden_features]
    fan_outs = [hidden_features] * depth + [out_features, out_features]
    keys = jax.random.split(key, 2 * len(names))
    for i, (name, fi, fo) in enumerate(zip(names, fan_ins, fan_outs)):
        bound = 1.0 / (fi ** 0.5)
        w = jax.random.uniform(keys[2 * i], (fi, fo), jnp.float32, -bound, bound)
        b = jax.random.uniform(keys[2 * i + 1], (1, fo), jnp.float32, -bound, bound)
        params[name] = w
        params["b" + name[1:]] = b
    return params


def mapping_network_ref(x, params, depth=3):
    """Pure-JAX reference matching the PyTorch module."""
    norm = jnp.sqrt(jnp.sum(x * x, axis=-1, keepdims=True))
    h = x / jnp.maximum(norm, 1e-12)
    for i in range(depth):
        h = h @ params[f"w{i + 1}"] + params[f"b{i + 1}"]
        h = jnp.where(h >= 0, h, 0.2 * h)
    gamma = h @ params["wg"] + params["bg"]
    beta = h @ params["wb"] + params["bb"]
    return gamma, beta


if __name__ == "__main__":
    batch = 8
    hidden_features = 32
    out_features = 16

    key = jax.random.PRNGKey(0)
    k_x, k_p = jax.random.split(key)
    x = jax.random.normal(k_x, (batch, hidden_features), jnp.float32)
    params = init_params(k_p, hidden_features, out_features, depth=3)
    packed = pack_params(params, out_features, depth=3)

    fn = jax.jit(functools.partial(mapping_network_pallas,
                                   out_features=out_features))
    gamma, beta = fn(x, packed)
    jax.block_until_ready((gamma, beta))

    gamma_ref, beta_ref = mapping_network_ref(x, params)
    assert gamma.shape == (batch, out_features)
    assert beta.shape == (batch, out_features)
    assert jnp.allclose(gamma, gamma_ref, atol=1e-5, rtol=1e-5)
    assert jnp.allclose(beta, beta_ref, atol=1e-5, rtol=1e-5)

    print("KERNEL_OK")
</pallas_src>

<mosaic_0001>
module attributes {stable_mosaic.version = 11 : i64} {
  func.func @_mapping_kernel(%arg0: i32, %arg1: memref<8x32xf32, #tpu.memory_space<vmem>>, %arg2: memref<3x32x32xf32, #tpu.memory_space<vmem>>, %arg3: memref<3x32xf32, #tpu.memory_space<vmem>>, %arg4: memref<32x128xf32, #tpu.memory_space<vmem>>, %arg5: memref<1x128xf32, #tpu.memory_space<vmem>>, %arg6: memref<8x128xf32, #tpu.memory_space<vmem>>) attributes {dimension_semantics = [#tpu.dimension_semantics<parallel>], iteration_bounds = array<i64: 1>, scalar_prefetch = 0 : i64, scratch_operands = 0 : i64, tpu.core_type = #tpu.core_type<tc>, window_params = [{transform_indices = @transform_0, window_bounds = array<i64: 8, 32>}, {pipeline_mode = #tpu.pipeline_mode<synchronous>, transform_indices = @transform_1, window_bounds = array<i64: 3, 32, 32>}, {pipeline_mode = #tpu.pipeline_mode<synchronous>, transform_indices = @transform_2, window_bounds = array<i64: 3, 32>}, {pipeline_mode = #tpu.pipeline_mode<synchronous>, transform_indices = @transform_3, window_bounds = array<i64: 32, 128>}, {pipeline_mode = #tpu.pipeline_mode<synchronous>, transform_indices = @transform_4, window_bounds = array<i64: 1, 128>}, {transform_indices = @transform_5, window_bounds = array<i64: 8, 128>}]} {
    %c0 = arith.constant 0 : index
    %c0_0 = arith.constant 0 : index
    %0 = vector.load %arg1[%c0, %c0_0] : memref<8x32xf32, #tpu.memory_space<vmem>>, vector<8x32xf32>
    %1 = arith.mulf %0, %0 : vector<8x32xf32>
    %cst = arith.constant dense<0.000000e+00> : vector<8xf32>
    %2 = vector.multi_reduction <add>, %1, %cst [1] : vector<8x32xf32> to vector<8xf32>
    %3 = vector.shape_cast %2 : vector<8xf32> to vector<8x1xf32>
    %cst_1 = arith.constant 1.000000e-24 : f32
    %4 = vector.broadcast %cst_1 : f32 to vector<8x1xf32>
    %5 = arith.maximumf %3, %4 : vector<8x1xf32>
    %6 = math.rsqrt %5 : vector<8x1xf32>
    %7 = vector.broadcast %6 : vector<8x1xf32> to vector<8x32xf32>
    %8 = arith.mulf %0, %7 : vector<8x32xf32>
    %c0_2 = arith.constant 0 : index
    %c0_3 = arith.constant 0 : index
    %9 = vector.load %arg3[%c0_2, %c0_3] : memref<3x32xf32, #tpu.memory_space<vmem>>, vector<3x32xf32>
    %c0_4 = arith.constant 0 : index
    %c0_5 = arith.constant 0 : index
    %c0_6 = arith.constant 0 : index
    %10 = vector.load %arg2[%c0_4, %c0_5, %c0_6] : memref<3x32x32xf32, #tpu.memory_space<vmem>>, vector<1x32x32xf32>
    %11 = vector.shape_cast %10 : vector<1x32x32xf32> to vector<32x32xf32>
    %cst_7 = arith.constant dense<0.000000e+00> : vector<8x32xf32>
    %12 = tpu.matmul %8, %11, %cst_7 {dimension_numbers = #tpu.dot_dimension_numbers<[1], [0], [0], [1], [0, 0, 1, 1], [], []>} : vector<8x32xf32>, vector<32x32xf32>, vector<8x32xf32> -> vector<8x32xf32>
    %13 = vector.extract_strided_slice %9 {offsets = [0, 0], sizes = [1, 32], strides = [1, 1]} : vector<3x32xf32> to vector<1x32xf32>
    %14 = vector.broadcast %13 : vector<1x32xf32> to vector<8x32xf32>
    %15 = arith.addf %12, %14 : vector<8x32xf32>
    %cst_8 = arith.constant 0.000000e+00 : f32
    %16 = vector.broadcast %cst_8 : f32 to vector<8x32xf32>
    %17 = arith.cmpf oge, %15, %16 : vector<8x32xf32>
    %cst_9 = arith.constant 2.000000e-01 : f32
    %18 = vector.broadcast %cst_9 : f32 to vector<8x32xf32>
    %19 = arith.mulf %18, %15 : vector<8x32xf32>
    %20 = arith.select %17, %15, %19 : vector<8x32xi1>, vector<8x32xf32>
    %c1 = arith.constant 1 : index
    %c0_10 = arith.constant 0 : index
    %c0_11 = arith.constant 0 : index
    %21 = vector.load %arg2[%c1, %c0_10, %c0_11] : memref<3x32x32xf32, #tpu.memory_space<vmem>>, vector<1x32x32xf32>
    %22 = vector.shape_cast %21 : vector<1x32x32xf32> to vector<32x32xf32>
    %cst_12 = arith.constant dense<0.000000e+00> : vector<8x32xf32>
    %23 = tpu.matmul %20, %22, %cst_12 {dimension_numbers = #tpu.dot_dimension_numbers<[1], [0], [0], [1], [0, 0, 1, 1], [], []>} : vector<8x32xf32>, vector<32x32xf32>, vector<8x32xf32> -> vector<8x32xf32>
    %24 = vector.extract_strided_slice %9 {offsets = [1, 0], sizes = [1, 32], strides = [1, 1]} : vector<3x32xf32> to vector<1x32xf32>
    %25 = vector.broadcast %24 : vector<1x32xf32> to vector<8x32xf32>
    %26 = arith.addf %23, %25 : vector<8x32xf32>
    %cst_13 = arith.constant 0.000000e+00 : f32
    %27 = vector.broadcast %cst_13 : f32 to vector<8x32xf32>
    %28 = arith.cmpf oge, %26, %27 : vector<8x32xf32>
    %cst_14 = arith.constant 2.000000e-01 : f32
    %29 = vector.broadcast %cst_14 : f32 to vector<8x32xf32>
    %30 = arith.mulf %29, %26 : vector<8x32xf32>
    %31 = arith.select %28, %26, %30 : vector<8x32xi1>, vector<8x32xf32>
    %c2 = arith.constant 2 : index
    %c0_15 = arith.constant 0 : index
    %c0_16 = arith.constant 0 : index
    %32 = vector.load %arg2[%c2, %c0_15, %c0_16] : memref<3x32x32xf32, #tpu.memory_space<vmem>>, vector<1x32x32xf32>
    %33 = vector.shape_cast %32 : vector<1x32x32xf32> to vector<32x32xf32>
    %cst_17 = arith.constant dense<0.000000e+00> : vector<8x32xf32>
    %34 = tpu.matmul %31, %33, %cst_17 {dimension_numbers = #tpu.dot_dimension_numbers<[1], [0], [0], [1], [0, 0, 1, 1], [], []>} : vector<8x32xf32>, vector<32x32xf32>, vector<8x32xf32> -> vector<8x32xf32>
    %35 = vector.extract_strided_slice %9 {offsets = [2, 0], sizes = [1, 32], strides = [1, 1]} : vector<3x32xf32> to vector<1x32xf32>
    %36 = vector.broadcast %35 : vector<1x32xf32> to vector<8x32xf32>
    %37 = arith.addf %34, %36 : vector<8x32xf32>
    %cst_18 = arith.constant 0.000000e+00 : f32
    %38 = vector.broadcast %cst_18 : f32 to vector<8x32xf32>
    %39 = arith.cmpf oge, %37, %38 : vector<8x32xf32>
    %cst_19 = arith.constant 2.000000e-01 : f32
    %40 = vector.broadcast %cst_19 : f32 to vector<8x32xf32>
    %41 = arith.mulf %40, %37 : vector<8x32xf32>
    %42 = arith.select %39, %37, %41 : vector<8x32xi1>, vector<8x32xf32>
    %c0_20 = arith.constant 0 : index
    %c0_21 = arith.constant 0 : index
    %43 = vector.load %arg4[%c0_20, %c0_21] : memref<32x128xf32, #tpu.memory_space<vmem>>, vector<32x128xf32>
    %cst_22 = arith.constant dense<0.000000e+00> : vector<8x128xf32>
    %44 = tpu.matmul %42, %43, %cst_22 {dimension_numbers = #tpu.dot_dimension_numbers<[1], [0], [0], [1], [0, 0, 1, 1], [], []>} : vector<8x32xf32>, vector<32x128xf32>, vector<8x128xf32> -> vector<8x128xf32>
    %c0_23 = arith.constant 0 : index
    %c0_24 = arith.constant 0 : index
    %45 = vector.load %arg5[%c0_23, %c0_24] : memref<1x128xf32, #tpu.memory_space<vmem>>, vector<1x128xf32>
    %46 = vector.broadcast %45 : vector<1x128xf32> to vector<8x128xf32>
    %47 = arith.addf %44, %46 : vector<8x128xf32>
    %c0_25 = arith.constant 0 : index
    %c0_26 = arith.constant 0 : index
    %48 = vector.load %arg6[%c0_25, %c0_26] : memref<8x128xf32, #tpu.memory_space<vmem>>, vector<8x128xf32>
    tpu.vector_store %arg6[%c0_25, %c0_26], %47 {strides = array<i32>} : memref<8x128xf32, #tpu.memory_space<vmem>>, vector<8x128xf32>,
    return
  }
  func.func @transform_0(%arg0: i32) -> (i32, i32) {
    %c0_i32 = arith.constant 0 : i32
    %c0_i32_0 = arith.constant 0 : i32
    return %arg0, %c0_i32 : i32, i32
  }
  func.func @transform_1(%arg0: i32) -> (i32, i32, i32) {
    %c0_i32 = arith.constant 0 : i32
    %c0_i32_0 = arith.constant 0 : i32
    %c0_i32_1 = arith.constant 0 : i32
    %c0_i32_2 = arith.constant 0 : i32
    return %c0_i32, %c0_i32_0, %c0_i32_1 : i32, i32, i32
  }
  func.func @transform_2(%arg0: i32) -> (i32, i32) {
    %c0_i32 = arith.constant 0 : i32
    %c0_i32_0 = arith.constant 0 : i32
    %c0_i32_1 = arith.constant 0 : i32
    return %c0_i32, %c0_i32_0 : i32, i32
  }
  func.func @transform_3(%arg0: i32) -> (i32, i32) {
    %c0_i32 = arith.constant 0 : i32
    %c0_i32_0 = arith.constant 0 : i32
    %c0_i32_1 = arith.constant 0 : i32
    return %c0_i32, %c0_i32_0 : i32, i32
  }
  func.func @transform_4(%arg0: i32) -> (i32, i32) {
    %c0_i32 = arith.constant 0 : i32
    %c0_i32_0 = arith.constant 0 : i32
    %c0_i32_1 = arith.constant 0 : i32
    return %c0_i32, %c0_i32_0 : i32, i32
  }
  func.func @transform_5(%arg0: i32) -> (i32, i32) {
    %c0_i32 = arith.constant 0 : i32
    %c0_i32_0 = arith.constant 0 : i32
    return %arg0, %c0_i32 : i32, i32
  }
}

</mosaic_0001>

<llo_original>
// kernel: mapping_network_pallas.1
$region0: #{mapping_network_pallas.1}
  #allocation0 [shape = 'u32[]', space=smem, size = 0x4, offset = 0x4, fixed_abs, tag = 'smem constant byte address 0x4 - core index']
  #allocation1 [shape = 'u32[72,128]{1,0:T(1,128)}', space=vmem, size = 0x9000, scoped, tag = 'internal scratch']
  %s0 = inlined_call_operand.hbm [shape: f32[8,32], index: 0, kind: input, shape index: {}]
  %s1 = inlined_call_operand.hbm [shape: f32[3,32,32], index: 1, kind: input, shape index: {}]
  %s2 = inlined_call_operand.hbm [shape: f32[3,32], index: 2, kind: input, shape index: {}]
  %s3 = inlined_call_operand.hbm [shape: f32[32,128], index: 3, kind: input, shape index: {}]
  %s4 = inlined_call_operand.hbm [shape: f32[1,128], index: 4, kind: input, shape index: {}]
  %s5 = inlined_call_operand.vmem [shape: f32[8,128], index: 5, kind: output, shape index: {}]
  %s6 = sld [smem:[#allocation0]]
  $region50: #{mapping_network_pallas.1} parent=0
    _
  %s8 = ssub.s32 1, %s6
  %s9 = scalar_select 0, %s8, %s6
  $region1: #{mapping_network_pallas.1} parent=0
    #allocation2 [shape = 'u8[4096]{0}', space=vmem, size = 0x1000, scoped, tag = 'input window, operand 0, single buffered']
    #allocation3 [shape = 's32[1]{0}', space=sflag, size = 0x4, scoped, tag = 'scoped memory for mapping_network_pallas.1']
    #allocation4 [shape = 'u8[49152]{0}', space=vmem, size = 0xc000, scoped, tag = 'input window, operand 1, single buffered']
    #allocation5 [shape = 's32[1]{0}', space=sflag, size = 0x4, scoped, tag = 'scoped memory for mapping_network_pallas.1']
    #allocation6 [shape = 'u8[2048]{0}', space=vmem, size = 0x800, scoped, tag = 'input window, operand 2, single buffered']
    #allocation7 [shape = 'u8[16384]{0}', space=vmem, size = 0x4000, scoped, tag = 'input window, operand 3, single buffered']
    #allocation8 [shape = 's32[1]{0}', space=sflag, size = 0x4, scoped, tag = 'scoped memory for mapping_network_pallas.1']
    #allocation9 [shape = 'u8[512]{0}', space=vmem, size = 0x400, scoped, tag = 'input window, operand 4, single buffered']
    %10 = vsyncpa [#allocation3], 0
    %11 = vsyncpa [#allocation5], 0
    %12 = vsyncpa [#allocation8], 0
    // Predicated region
    $region2: #{mapping_network_pallas.1} parent=1 // pred_check
      _
    $region3: #{mapping_network_pallas.1} parent=1 // pred_check_branch
      %14 = sbr.rel (0) target = $region5
    $region4: #{mapping_network_pallas.1} parent=1 // pred_region
      %16 = vsyncadd [#allocation3], 0
      %s18 = sshll.u32 %s0, 4
      %s19 = int_to_ptr.hbm [resolvable:$true] %s18
      %s20 = sshll.u32 [#allocation2], 4
      %s21 = int_to_ptr.vmem [resolvable:$true] %s20
      %23 = dma.hbm_to_vmem [thread:$0]  %s19, 128, %s21, [#allocation3]
    $region5: #{mapping_network_pallas.1} parent=1 // pred_fallthru
      _
    // Predicated region
    $region6: #{mapping_network_pallas.1} parent=1 // pred_check
      _
    $region7: #{mapping_network_pallas.1} parent=1 // pred_check_branch
      %25 = sbr.rel (0) target = $region9
    $region8: #{mapping_network_pallas.1} parent=1 // pred_region
      %27 = vsyncadd [#allocation5], 0
      %s28 = sshll.u32 %s1, 4
      %s29 = int_to_ptr.hbm [resolvable:$true] %s28
      %s30 = sshll.u32 [#allocation4], 4
      %s31 = int_to_ptr.vmem [resolvable:$true] %s30
      %36 = dma.hbm_to_vmem [thread:$0]  %s29, 1536, %s31, [#allocation5], 128, 128, 8
    $region9: #{mapping_network_pallas.1} parent=1 // pred_fallthru
      _
    // Predicated region
    $region10: #{mapping_network_pallas.1} parent=1 // pred_check
      _
    $region11: #{mapping_network_pallas.1} parent=1 // pred_check_branch
      %38 = sbr.rel (0) target = $region13
    $region12: #{mapping_network_pallas.1} parent=1 // pred_region
      %40 = vsyncadd [#allocation5], 0
      %s42 = sshll.u32 %s2, 4
      %s43 = int_to_ptr.hbm [resolvable:$true] %s42
      %s44 = sshll.u32 [#allocation6], 4
      %s45 = int_to_ptr.vmem [resolvable:$true] %s44
      %47 = dma.hbm_to_vmem [thread:$0]  %s43, 64, %s45, [#allocation5]
    $region13: #{mapping_network_pallas.1} parent=1 // pred_fallthru
      _
    // Predicated region
    $region14: #{mapping_network_pallas.1} parent=1 // pred_check
      _
    $region15: #{mapping_network_pallas.1} parent=1 // pred_check_branch
      %49 = sbr.rel (0) target = $region17
    $region16: #{mapping_network_pallas.1} parent=1 // pred_region
      %51 = vsyncadd [#allocation8], 0
      %s52 = sshll.u32 %s3, 4
      %s53 = int_to_ptr.hbm [resolvable:$true] %s52
      %s54 = sshll.u32 [#allocation7], 4
      %s55 = int_to_ptr.vmem [resolvable:$true] %s54
      %60 = dma.hbm_to_vmem [thread:$0]  %s53, 512, %s55, [#allocation8], 128, 128, 8
    $region17: #{mapping_network_pallas.1} parent=1 // pred_fallthru
      _
    // Predicated region
    $region18: #{mapping_network_pallas.1} parent=1 // pred_check
      _
    $region19: #{mapping_network_pallas.1} parent=1 // pred_check_branch
      %62 = sbr.rel (0) target = $region21
    $region20: #{mapping_network_pallas.1} parent=1 // pred_region
      %64 = vsyncadd [#allocation8], 0
      %s66 = sshll.u32 %s4, 4
      %s67 = int_to_ptr.hbm [resolvable:$true] %s66
      %s68 = sshll.u32 [#allocation9], 4
      %s69 = int_to_ptr.vmem [resolvable:$true] %s68
      %71 = dma.hbm_to_vmem [thread:$0]  %s67, 16, %s69, [#allocation8]
    $region21: #{mapping_network_pallas.1} parent=1 // pred_fallthru
      _
    // Predicated region
    $region22: #{mapping_network_pallas.1} parent=1 // pred_check
      _
    $region23: #{mapping_network_pallas.1} parent=1 // pred_check_branch
      %73 = sbr.rel (0) target = $region25
    $region24: #{mapping_network_pallas.1} parent=1 // pred_region
      %75 = dma.done [#allocation3], 128
    $region25: #{mapping_network_pallas.1} parent=1 // pred_fallthru
      _
    // Predicated region
    $region26: #{mapping_network_pallas.1} parent=1 // pred_check
      _
    $region27: #{mapping_network_pallas.1} parent=1 // pred_check_branch
      %77 = sbr.rel (0) target = $region29
    $region28: #{mapping_network_pallas.1} parent=1 // pred_region
      %79 = dma.done [#allocation5], 1536
    $region29: #{mapping_network_pallas.1} parent=1 // pred_fallthru
      _
    // Predicated region
    $region30: #{mapping_network_pallas.1} parent=1 // pred_check
      _
    $region31: #{mapping_network_pallas.1} parent=1 // pred_check_branch
      %81 = sbr.rel (0) target = $region33
    $region32: #{mapping_network_pallas.1} parent=1 // pred_region
      %83 = dma.done [#allocation5], 64
    $region33: #{mapping_network_pallas.1} parent=1 // pred_fallthru
      _
    // Predicated region
    $region34: #{mapping_network_pallas.1} parent=1 // pred_check
      _
    $region35: #{mapping_network_pallas.1} parent=1 // pred_check_branch
      %85 = sbr.rel (0) target = $region37
    $region36: #{mapping_network_pallas.1} parent=1 // pred_region
      %87 = dma.done [#allocation8], 512
    $region37: #{mapping_network_pallas.1} parent=1 // pred_fallthru
      _
    // Predicated region
    $region38: #{mapping_network_pallas.1} parent=1 // pred_check
      _
    $region39: #{mapping_network_pallas.1} parent=1 // pred_check_branch
      %89 = sbr.rel (0) target = $region41
    $region40: #{mapping_network_pallas.1} parent=1 // pred_region
      %91 = dma.done [#allocation8], 16
    $region41: #{mapping_network_pallas.1} parent=1 // pred_fallthru
      _
    %v92 = vld [vmem:[#allocation2] sm:$0xff]
    %v93 = vmul.f32 %v92, %v92
    %vm94 = vcmask 261120
    %v95 = vsel %vm94, %v93, 0.0
    %96 = vadd.xlane.f32.xlu0 %v95
    %v97 = vpop.xlane.xlu0 %96
    %v98 = vmax.f32 %v97, 1e-24
    %v99 = vrsqrt.pop %v98
    %v100 = vmul.f32 %v99, %v98
    %v101 = vmul.f32 %v100, %v99
    %v102 = vmul.f32 0.5, %v101
    %v103 = vsub.f32 1.5, %v102
    %v104 = vmul.f32 %v99, %v103
    %vm105 = vweird.f32 %v98
    %vm106 = vweird.f32 %v99
    %vm107 = vmor %vm105, %vm106
    %v108 = vsel %vm107, %v99, %v104
    %v109 = vmul.f32 %v92, %v108
    %v110 = vld [vmem:[#allocation6] sm:$0x7]
    %v111 = vld [vmem:[#allocation4] sm:$0xff]
    %v112 = vld [vmem:[#allocation4 + $0x8] sm:$0xff]
    %v113 = vld [vmem:[#allocation4 + $0x10] sm:$0xff]
    %v114 = vld [vmem:[#allocation4 + $0x18] sm:$0xff]
    %v115 = vperm.slane %v110, 0
    %v117 = vsel %vm94, %v109, 0
    %119 = vmatpush.msra.mxu0 0.0
    %120 = vmatpush.msra.mxu0 0.0
    %121 = vmatpush.msra.mxu0 0.0
    %122 = vmatpush.msra.mxu0 0.0
    %123 = vmatpush.msra.mxu0 0.0
    %124 = vmatpush.msra.mxu0 0.0
    %125 = vmatpush.msra.mxu0 0.0
    %126 = vmatpush.msra.mxu0 0.0
    %127 = vmatpush.msra.mxu0 0.0
    %128 = vmatpush.msra.mxu0 0.0
    %129 = vmatpush.msra.mxu0 0.0
    %130 = vmatpush.msra.mxu0 0.0
    %131 = vmatpush.msra.mxu0 %v114
    %132 = vmatpush.msra.mxu0 %v113
    %133 = vmatpush.msra.mxu0 %v112
    %134 = vmatpush.msra.mxu0 %v111
    %135 = vmatmul.f32.gmra.mxu0 %v117
    %v136 = vpop.f32.mrf.mxu0
    %v137 = vadd.f32 %v115, %v136
    %138 = vdwg.mxu0
    %vm139 = vcmp.ge.f32.partialorder %v137, 0.0
    %v140 = vmul.f32 %v137, 0.2
    %v141 = vsel %vm139, %v137, %v140
    %s142 = scalar_lea.vmem [#allocation4], 32
    %v143 = vld [vmem:[%s142] sm:$0xff]
    %v144 = vld [vmem:[%s142 + $0x8] sm:$0xff]
    %v145 = vld [vmem:[%s142 + $0x10] sm:$0xff]
    %v146 = vld [vmem:[%s142 + $0x18] sm:$0xff]
    %v147 = vperm.slane %v110, 1
    %v149 = vsel %vm94, %v141, 0
    %151 = vmatpush.msra.mxu0 0.0
    %152 = vmatpush.msra.mxu0 0.0
    %153 = vmatpush.msra.mxu0 0.0
    %154 = vmatpush.msra.mxu0 0.0
    %155 = vmatpush.msra.mxu0 0.0
    %156 = vmatpush.msra.mxu0 0.0
    %157 = vmatpush.msra.mxu0 0.0
    %158 = vmatpush.msra.mxu0 0.0
    %159 = vmatpush.msra.mxu0 0.0
    %160 = vmatpush.msra.mxu0 0.0
    %161 = vmatpush.msra.mxu0 0.0
    %162 = vmatpush.msra.mxu0 0.0
    %163 = vmatpush.msra.mxu0 %v146
    %164 = vmatpush.msra.mxu0 %v145
    %165 = vmatpush.msra.mxu0 %v144
    %166 = vmatpush.msra.mxu0 %v143
    %167 = vmatmul.f32.gmra.mxu0 %v149
    %v168 = vpop.f32.mrf.mxu0
    %v169 = vadd.f32 %v147, %v168
    %170 = vdwg.mxu0
    %vm171 = vcmp.ge.f32.partialorder %v169, 0.0
    %v172 = vmul.f32 %v169, 0.2
    %v173 = vsel %vm171, %v169, %v172
    %s174 = scalar_lea.vmem [#allocation4], 64
    %v175 = vld [vmem:[%s174] sm:$0xff]
    %v176 = vld [vmem:[%s174 + $0x8] sm:$0xff]
    %v177 = vld [vmem:[%s174 + $0x10] sm:$0xff]
    %v178 = vld [vmem:[%s174 + $0x18] sm:$0xff]
    %v179 = vperm.slane %v110, 2
    %v181 = vsel %vm94, %v173, 0
    %183 = vmatpush.msra.mxu0 0.0
    %184 = vmatpush.msra.mxu0 0.0
    %185 = vmatpush.msra.mxu0 0.0
    %186 = vmatpush.msra.mxu0 0.0
    %187 = vmatpush.msra.mxu0 0.0
    %188 = vmatpush.msra.mxu0 0.0
    %189 = vmatpush.msra.mxu0 0.0
    %190 = vmatpush.msra.mxu0 0.0
    %191 = vmatpush.msra.mxu0 0.0
    %192 = vmatpush.msra.mxu0 0.0
    %193 = vmatpush.msra.mxu0 0.0
    %194 = vmatpush.msra.mxu0 0.0
    %195 = vmatpush.msra.mxu0 %v178
    %196 = vmatpush.msra.mxu0 %v177
    %197 = vmatpush.msra.mxu0 %v176
    %198 = vmatpush.msra.mxu0 %v175
    %199 = vmatmul.f32.gmra.mxu0 %v181
    %v200 = vpop.f32.mrf.mxu0
    %v201 = vadd.f32 %v179, %v200
    %202 = vdwg.mxu0
    %vm203 = vcmp.ge.f32.partialorder %v201, 0.0
    %v204 = vmul.f32 %v201, 0.2
    %v205 = vsel %vm203, %v201, %v204
    %v206 = vld [vmem:[#allocation7] sm:$0xff]
    %v207 = vld [vmem:[#allocation7 + $0x8] sm:$0xff]
    %v208 = vld [vmem:[#allocation7 + $0x10] sm:$0xff]
    %v209 = vld [vmem:[#allocation7 + $0x18] sm:$0xff]
    %v210 = vld [vmem:[#allocation9] sm:$0x1]
    %v212 = vperm.slane %v210, 0
    %v215 = vsel %vm94, %v205, 0
    %217 = vmatpush.msra.mxu0 0.0
    %218 = vmatpush.msra.mxu0 0.0
    %219 = vmatpush.msra.mxu0 0.0
    %220 = vmatpush.msra.mxu0 0.0
    %221 = vmatpush.msra.mxu0 0.0
    %222 = vmatpush.msra.mxu0 0.0
    %223 = vmatpush.msra.mxu0 0.0
    %224 = vmatpush.msra.mxu0 0.0
    %225 = vmatpush.msra.mxu0 0.0
    %226 = vmatpush.msra.mxu0 0.0
    %227 = vmatpush.msra.mxu0 0.0
    %228 = vmatpush.msra.mxu0 0.0
    %229 = vmatpush.msra.mxu0 %v209
    %230 = vmatpush.msra.mxu0 %v208
    %231 = vmatpush.msra.mxu0 %v207
    %232 = vmatpush.msra.mxu0 %v206
    %233 = vmatmul.f32.gmra.mxu0 %v215
    %v234 = vpop.f32.mrf.mxu0
    %v235 = vadd.f32 %v212, %v234
    %236 = vdwg.mxu0
    %237 = vst [vmem:[%s5] sm:$0xff] %v235
    // Predicated region
    $region42: #{mapping_network_pallas.1} parent=1 // pred_check
      _
    $region43: #{mapping_network_pallas.1} parent=1 // pred_check_branch
      %239 = sbr.rel (0) target = $region45
    $region44: #{mapping_network_pallas.1} parent=1 // pred_region
      _
    $region45: #{mapping_network_pallas.1} parent=1 // pred_fallthru
      _
    // Predicated region
    $region46: #{mapping_network_pallas.1} parent=1 // pred_check
      _
    $region47: #{mapping_network_pallas.1} parent=1 // pred_check_branch
      %241 = sbr.rel (0) target = $region49
    $region48: #{mapping_network_pallas.1} parent=1 // pred_region
      _
    $region49: #{mapping_network_pallas.1} parent=1 // pred_fallthru
      _
    %242 = vsyncpa [#allocation3], 1
    %243 = vsyncpa [#allocation5], 1
    %244 = vsyncpa [#allocation8], 1

</llo_original>
